<compile_context>
chip_gen: v7x
topology: tpu7x:2x2x1
jax: 0.10.0
libtpu: 0.0.40
codegen_flags: <defaults>
</compile_context>

<pallas_src>
import jax
import jax.numpy as jnp
from jax.experimental import pallas as pl
from jax.experimental.pallas import tpu as pltpu


def _wave_source_kernel(bt_ref, bext_ref, mask_ref, b_hbm_ref, out_ref):
    # bt_ref    : VMEM (batch_tile, 1, 1)  per-row source amplitude
    # bext_ref  : VMEM (1, H, W)           static external field
    # mask_ref  : VMEM (1, H, W)           excitation mask (module buffer)
    # b_hbm_ref : HBM  (batch, H, W)       never read (clone-then-overwrite);
    #                                      present only for output aliasing
    # out_ref   : VMEM (batch_tile, H, W)
    del b_hbm_ref
    out = bext_ref[...] + bt_ref[...] * mask_ref[...]
    out_ref[...] = out.astype(out_ref.dtype)


def _choose_batch_tile(batch, H, W, itemsize, target_block_bytes=1 << 20):
    """~1 MiB output blocks, but keep >=2 grid steps so v7x's two TCs split work."""
    per_row = max(1, H * W * itemsize)
    tile = max(1, min(batch, target_block_bytes // per_row))
    if batch >= 2:
        tile = min(tile, pl.cdiv(batch, 2))
    return int(tile)


def wave_source(B, B_ext_0, Bt, excitation_mask, *, batch_tile=None):
    """out[b] = B_ext_0 + Bt[b] * excitation_mask   (pure VPU / HBM-bandwidth)."""
    batch, H, W = B.shape
    assert B_ext_0.shape == (H, W) and excitation_mask.shape == (H, W)
    assert Bt.shape == (batch,)

    out_dtype = jnp.result_type(B_ext_0.dtype, Bt.dtype, excitation_mask.dtype)
    if batch_tile is None:
        batch_tile = _choose_batch_tile(batch, H, W, jnp.dtype(out_dtype).itemsize)
    grid = (pl.cdiv(batch, batch_tile),)

    bt3 = Bt.reshape(batch, 1, 1)
    bext3 = B_ext_0.reshape(1, H, W)
    mask3 = excitation_mask.reshape(1, H, W)

    # In-place semantics: B is clone-then-overwritten in the reference, so its
    # HBM buffer can legally back the output (no second batch*H*W allocation).
    alias = {3: 0} if B.dtype == out_dtype else {}

    # TODO(synk): for very large spatial fields (H*W*itemsize approaching the
    # VMEM budget, esp. v7x's 64 MiB), add a W-tiling grid axis instead of
    # whole-(H, W) blocks.
    return pl.pallas_call(
        _wave_source_kernel,
        out_shape=jax.ShapeDtypeStruct((batch, H, W), out_dtype),
        grid=grid,
        in_specs=[
            pl.BlockSpec((batch_tile, 1, 1), lambda i: (i, 0, 0)),  # Bt
            pl.BlockSpec((1, H, W), lambda i: (0, 0, 0)),           # B_ext_0
            pl.BlockSpec((1, H, W), lambda i: (0, 0, 0)),           # mask
            pl.BlockSpec(memory_space=pl.ANY),                      # B (never read)
        ],
        out_specs=pl.BlockSpec((batch_tile, H, W), lambda i: (i, 0, 0)),
        input_output_aliases=alias,
        compiler_params=pltpu.CompilerParams(
            dimension_semantics=("parallel",)),
    )(bt3, bext3, mask3, B)


if __name__ == "__main__":
    key = jax.random.PRNGKey(0)
    k_b, k_bext, k_bt = jax.random.split(key, 3)

    batch, H, W = 2, 16, 128

    # Deterministic excitation mask (module buffer): a vertical source line.
    excitation_mask = jnp.zeros((H, W), dtype=jnp.float32)
    excitation_mask = excitation_mask.at[4:12, 4].set(1.0)

    B = jax.random.normal(k_b, (batch, H, W), dtype=jnp.float32)
    B_ext_0 = jax.random.normal(k_bext, (H, W), dtype=jnp.float32)
    Bt = jax.random.normal(k_bt, (batch,), dtype=jnp.float32)

    # Donate B so the input/output alias actually reuses its HBM buffer.
    fn = jax.jit(wave_source, donate_argnums=0)
    out = jax.block_until_ready(fn(B, B_ext_0, Bt, excitation_mask))

    # Pure-JAX reference of the PyTorch forward (broadcasted).
    ref = B_ext_0[None] + Bt[:, None, None] * excitation_mask[None]

    assert out.shape == (batch, H, W)
    assert out.dtype == jnp.float32
    assert jnp.allclose(out, ref, atol=1e-6, rtol=1e-6)
    print("KERNEL_OK")
</pallas_src>

<mosaic_0001>
module attributes {stable_mosaic.version = 11 : i64} {
  func.func @_wave_source_kernel(%arg0: i32, %arg1: memref<1x1x1xf32, #tpu.memory_space<vmem>>, %arg2: memref<1x16x128xf32, #tpu.memory_space<vmem>>, %arg3: memref<1x16x128xf32, #tpu.memory_space<vmem>>, %arg4: memref<2x16x128xf32, #tpu.memory_space<any>>, %arg5: memref<1x16x128xf32, #tpu.memory_space<vmem>>) attributes {dimension_semantics = [#tpu.dimension_semantics<parallel>], iteration_bounds = array<i64: 2>, scalar_prefetch = 0 : i64, scratch_operands = 0 : i64, tpu.core_type = #tpu.core_type<tc>, window_params = [{transform_indices = @transform_0, window_bounds = array<i64: 1, 1, 1>}, {pipeline_mode = #tpu.pipeline_mode<synchronous>, transform_indices = @transform_1, window_bounds = array<i64: 1, 16, 128>}, {pipeline_mode = #tpu.pipeline_mode<synchronous>, transform_indices = @transform_2, window_bounds = array<i64: 1, 16, 128>}, {}, {transform_indices = @transform_4, window_bounds = array<i64: 1, 16, 128>}]} {
    %c0 = arith.constant 0 : index
    %c0_0 = arith.constant 0 : index
    %c0_1 = arith.constant 0 : index
    %0 = vector.load %arg2[%c0, %c0_0, %c0_1] : memref<1x16x128xf32, #tpu.memory_space<vmem>>, vector<1x16x128xf32>
    %c0_2 = arith.constant 0 : index
    %c0_3 = arith.constant 0 : index
    %c0_4 = arith.constant 0 : index
    %1 = vector.load %arg1[%c0_2, %c0_3, %c0_4] : memref<1x1x1xf32, #tpu.memory_space<vmem>>, vector<1x1x1xf32>
    %c0_5 = arith.constant 0 : index
    %c0_6 = arith.constant 0 : index
    %c0_7 = arith.constant 0 : index
    %2 = vector.load %arg3[%c0_5, %c0_6, %c0_7] : memref<1x16x128xf32, #tpu.memory_space<vmem>>, vector<1x16x128xf32>
    %3 = vector.broadcast %1 : vector<1x1x1xf32> to vector<1x16x128xf32>
    %4 = arith.mulf %3, %2 : vector<1x16x128xf32>
    %5 = arith.addf %0, %4 : vector<1x16x128xf32>
    %c0_8 = arith.constant 0 : index
    %c0_9 = arith.constant 0 : index
    %c0_10 = arith.constant 0 : index
    %6 = vector.load %arg5[%c0_8, %c0_9, %c0_10] : memref<1x16x128xf32, #tpu.memory_space<vmem>>, vector<1x16x128xf32>
    tpu.vector_store %arg5[%c0_8, %c0_9, %c0_10], %5 {strides = array<i32>} : memref<1x16x128xf32, #tpu.memory_space<vmem>>, vector<1x16x128xf32>,
    return
  }
  func.func @transform_0(%arg0: i32) -> (i32, i32, i32) {
    %c0_i32 = arith.constant 0 : i32
    %c0_i32_0 = arith.constant 0 : i32
    %c0_i32_1 = arith.constant 0 : i32
    return %arg0, %c0_i32, %c0_i32_0 : i32, i32, i32
  }
  func.func @transform_1(%arg0: i32) -> (i32, i32, i32) {
    %c0_i32 = arith.constant 0 : i32
    %c0_i32_0 = arith.constant 0 : i32
    %c0_i32_1 = arith.constant 0 : i32
    %c0_i32_2 = arith.constant 0 : i32
    return %c0_i32, %c0_i32_0, %c0_i32_1 : i32, i32, i32
  }
  func.func @transform_2(%arg0: i32) -> (i32, i32, i32) {
    %c0_i32 = arith.constant 0 : i32
    %c0_i32_0 = arith.constant 0 : i32
    %c0_i32_1 = arith.constant 0 : i32
    %c0_i32_2 = arith.constant 0 : i32
    return %c0_i32, %c0_i32_0, %c0_i32_1 : i32, i32, i32
  }
  func.func @transform_4(%arg0: i32) -> (i32, i32, i32) {
    %c0_i32 = arith.constant 0 : i32
    %c0_i32_0 = arith.constant 0 : i32
    %c0_i32_1 = arith.constant 0 : i32
    return %arg0, %c0_i32, %c0_i32_0 : i32, i32, i32
  }
}

</mosaic_0001>

<llo_original>
// kernel: wave_source.1
$region0: #{wave_source.1}
  #allocation0 [shape = 'u32[]', space=smem, size = 0x4, offset = 0x4, fixed_abs, tag = 'smem constant byte address 0x4 - core index']
  #allocation1 [shape = 'u32[144,128]{1,0:T(1,128)}', space=vmem, size = 0x12000, scoped, tag = 'internal scratch']
  %s0 = inlined_call_operand.vmem [shape: f32[2,1,1], index: 0, kind: input, shape index: {}]
  %s1 = inlined_call_operand.vmem [shape: f32[1,16,128], index: 1, kind: input, shape index: {}]
  %s2 = inlined_call_operand.hbm [shape: f32[1,16,128], index: 2, kind: input, shape index: {}]
  %s3 = inlined_call_operand.hbm [shape: f32[2,16,128], index: 3, kind: input, shape index: {}, may-alias: {3,4}]
  %s4 = inlined_call_operand.hbm [shape: f32[2,16,128], index: 4, kind: output, shape index: {}, may-alias: {3,4}]
  %s5 = sld [smem:[#allocation0]]
  $region49: #{wave_source.1} parent=0
    _
  %s7 = ssub.s32 1, %s5
  %s8 = scalar_select 0, %s7, %s5
  $region1: #{wave_source.1} parent=0
    #allocation2 [shape = 'u8[8192]{0}', space=vmem, size = 0x2000, scoped, tag = 'input window, operand 2, single buffered']
    #allocation3 [shape = 's32[2]{0}', space=sflag, size = 0x8, scoped, tag = 'scoped memory for wave_source.1']
    #allocation4 [shape = 's32[2]{0}', space=sflag, size = 0x8, scoped, tag = 'scoped memory for wave_source.1']
    #allocation5 [shape = 'u8[16384]{0}', space=vmem, size = 0x4000, scoped, tag = 'output window, operand 0']
    %9 = vsyncpa [#allocation3], 0
    %10 = vsyncpa [#allocation4], 0
    %s11 = scalar_lea.sflag [#allocation4], 1
    %12 = vsyncpa %s11, 0
    loop: start=0, step=1, limit=4
    $region2: #{wave_source.1} parent=1 // loop_pre_header
      _
    $region3: #{wave_source.1} parent=1 // loop_header
      %s14 = sphi 0, %s18
      %p15 = scmp.ge.s32.totalorder %s14, 4
      %s24 = sphi 0, %s26
      %s27 = sphi 0, %s24
      %s28 = sphi 0, %s27
      %s44 = sphi 0, %s28
      %s48 = sphi 0, %s48
      %s50 = sphi 0, %s48
      %s51 = sphi 0, %s50
      %s65 = sphi 0, %s51
      %s69 = sphi 0, %s69
      %s71 = sphi 0, %s69
      %s72 = sphi 0, %s71
      %s86 = sphi 0, %s72
      %s92 = sphi 0, %s94
      %s95 = sphi 0, %s92
      %s96 = sphi 0, %s95
      %s112 = sphi 0, %s96
    $region4: #{wave_source.1} parent=1 // loop_header_branch
      %17 = sbr.rel (%p15) target = $region8
    $region5: #{wave_source.1} parent=1 // loop_body
      %s19 = ssub.s32 %s14, 1
      %s20 = ssub.s32 %s14, 2
      %s21 = sadd.s32 %s14, 1
      %s22 = ssub.s32 %s14, %s21
      %p23 = scmp.eq.s32.totalorder %s22, 0
      %s25 = sadd.s32 %s24, 1
      %s26 = scalar_select %p23, %s24, %s25
      %p29 = pneg %p23
      %p30 = scmp.eq.s32.totalorder %s14, 1
      %p31 = por %p29, %p30
      %p32 = scmp.ne.s32.totalorder %s24, %s27
      %p33 = scmp.eq.s32.totalorder %s14, 0
      %p34 = por %p32, %p33
      %p35 = scmp.ne.s32.totalorder %s24, %s27
      %p36 = scmp.eq.s32.totalorder %s19, 1
      %p37 = por %p35, %p36
      %p38 = scmp.ne.s32.totalorder %s27, %s28
      %p39 = scmp.eq.s32.totalorder %s19, 0
      %p40 = por %p38, %p39
      %p41 = scmp.ne.s32.totalorder %s27, %s28
      %p42 = scmp.eq.s32.totalorder %s20, 1
      %p43 = por %p41, %p42
      %p45 = scmp.ne.s32.totalorder %s28, %s44
      %p46 = scmp.eq.s32.totalorder %s20, 0
      %p47 = por %p45, %p46
      %s49 = sadd.s32 %s48, 1
      %p52 = scmp.eq.s32.totalorder %s14, 1
      %p53 = scmp.ne.s32.totalorder %s48, %s50
      %p54 = scmp.eq.s32.totalorder %s14, 0
      %p55 = por %p53, %p54
      %p56 = scmp.ne.s32.totalorder %s48, %s50
      %p57 = scmp.eq.s32.totalorder %s19, 1
      %p58 = por %p56, %p57
      %p59 = scmp.ne.s32.totalorder %s50, %s51
      %p60 = scmp.eq.s32.totalorder %s19, 0
      %p61 = por %p59, %p60
      %p62 = scmp.ne.s32.totalorder %s50, %s51
      %p63 = scmp.eq.s32.totalorder %s20, 1
      %p64 = por %p62, %p63
      %p66 = scmp.ne.s32.totalorder %s51, %s65
      %p67 = scmp.eq.s32.totalorder %s20, 0
      %p68 = por %p66, %p67
      %s70 = sadd.s32 %s69, 1
      %p73 = scmp.eq.s32.totalorder %s14, 1
      %p74 = scmp.ne.s32.totalorder %s69, %s71
      %p75 = scmp.eq.s32.totalorder %s14, 0
      %p76 = por %p74, %p75
      %p77 = scmp.ne.s32.totalorder %s69, %s71
      %p78 = scmp.eq.s32.totalorder %s19, 1
      %p79 = por %p77, %p78
      %p80 = scmp.ne.s32.totalorder %s71, %s72
      %p81 = scmp.eq.s32.totalorder %s19, 0
      %p82 = por %p80, %p81
      %p83 = scmp.ne.s32.totalorder %s71, %s72
      %p84 = scmp.eq.s32.totalorder %s20, 1
      %p85 = por %p83, %p84
      %p87 = scmp.ne.s32.totalorder %s72, %s86
      %p88 = scmp.eq.s32.totalorder %s20, 0
      %p89 = por %p87, %p88
      %s90 = ssub.s32 %s14, %s21
      %p91 = scmp.eq.s32.totalorder %s90, 0
      %s93 = sadd.s32 %s92, 1
      %s94 = scalar_select %p91, %s92, %s93
      %p97 = pneg %p91
      %p98 = scmp.eq.s32.totalorder %s14, 1
      %p99 = por %p97, %p98
      %p100 = scmp.ne.s32.totalorder %s92, %s95
      %p101 = scmp.eq.s32.totalorder %s14, 0
      %p102 = por %p100, %p101
      %p103 = scmp.ne.s32.totalorder %s92, %s95
      %p104 = scmp.eq.s32.totalorder %s19, 1
      %p105 = por %p103, %p104
      %p106 = scmp.ne.s32.totalorder %s95, %s96
      %p107 = scmp.eq.s32.totalorder %s19, 0
      %p108 = por %p106, %p107
      %p109 = scmp.ne.s32.totalorder %s95, %s96
      %p110 = scmp.eq.s32.totalorder %s20, 1
      %p111 = por %p109, %p110
      %p113 = scmp.ne.s32.totalorder %s96, %s112
      %p114 = scmp.eq.s32.totalorder %s20, 0
      %p115 = por %p113, %p114
      %p116 = scmp.le.s32.totalorder 1, %s14
      %p117 = scmp.lt.s32.totalorder %s14, 3
      %p118 = pnand %p116, %p117
      %p119 = pneg %p118
      // Predicated region
      $region9: #{wave_source.1} parent=5 // pred_check
        _
      $region10: #{wave_source.1} parent=5 // pred_check_branch
        %121 = sbr.rel (%p118) target = $region12
      $region11: #{wave_source.1} parent=5 // pred_region
        %s122 = ssub.s32 %s14, 1
        // Predicated region
        $region13: #{wave_source.1} parent=11 // pred_check
          %p123 = pneg %p61
        $region14: #{wave_source.1} parent=11 // pred_check_branch
          %125 = sbr.rel (%p123) target = $region16
        $region15: #{wave_source.1} parent=11 // pred_region
          _
        $region16: #{wave_source.1} parent=11 // pred_fallthru
          _
        // Predicated region
        $region17: #{wave_source.1} parent=11 // pred_check
          %p126 = pneg %p82
        $region18: #{wave_source.1} parent=11 // pred_check_branch
          %128 = sbr.rel (%p126) target = $region20
        $region19: #{wave_source.1} parent=11 // pred_region
          %s130 = ssub.s32 256, 256
          %131 = vsyncadd [#allocation3], %s130
          %s132 = sshll.u32 [#allocation2], 4
          %s133 = int_to_ptr.vmem [resolvable:$true] %s132
          %138 = dma.hbm_to_vmem [thread:$0]  %s2, 256, %s133, [#allocation3], 128, 128, 8
        $region20: #{wave_source.1} parent=11 // pred_fallthru
          _
      $region12: #{wave_source.1} parent=5 // pred_fallthru
        _
      %p139 = scmp.lt.s32.totalorder %s14, 2
      // Predicated region
      $region21: #{wave_source.1} parent=5 // pred_check
        %p140 = pneg %p139
      $region22: #{wave_source.1} parent=5 // pred_check_branch
        %142 = sbr.rel (%p140) target = $region24
      $region23: #{wave_source.1} parent=5 // pred_region
        // Predicated region
        $region25: #{wave_source.1} parent=23 // pred_check
          %p143 = pneg %p34
        $region26: #{wave_source.1} parent=23 // pred_check_branch
          %145 = sbr.rel (%p143) target = $region28
        $region27: #{wave_source.1} parent=23 // pred_region
          %p146 = scmp.lt.s32.totalorder %s14, 1
          %s147 = scalar_select %p146, %s14, 1
          %s148 = scalar_lea.vmem %s0, %s147
        $region28: #{wave_source.1} parent=23 // pred_fallthru
          _
      $region24: #{wave_source.1} parent=5 // pred_fallthru
        _
      %p149 = scmp.le.s32.totalorder 1, %s14
      %p150 = scmp.lt.s32.totalorder %s14, 3
      %p151 = pnand %p149, %p150
      %p152 = pneg %p151
      // Predicated region
      $region29: #{wave_source.1} parent=5 // pred_check
        _
      $region30: #{wave_source.1} parent=5 // pred_check_branch
        %154 = sbr.rel (%p151) target = $region32
      $region31: #{wave_source.1} parent=5 // pred_region
        %s155 = ssub.s32 %s14, 1
        // Predicated region
        $region33: #{wave_source.1} parent=31 // pred_check
          %p156 = pneg %p82
        $region34: #{wave_source.1} parent=31 // pred_check_branch
          %158 = sbr.rel (%p156) target = $region36
        $region35: #{wave_source.1} parent=31 // pred_region
          %159 = dma.done [#allocation3], 256
        $region36: #{wave_source.1} parent=31 // pred_fallthru
          _
        %p160 = scmp.lt.s32.totalorder %s19, 1
        %s161 = scalar_select %p160, %s19, 1
        %s162 = scalar_lea.vmem %s0, %s161
        %p163 = pneg %p40
        %p164 = pneg %p37
        %p165 = pneg %p61
        %p166 = pneg %p58
        %p167 = pneg %p82
        %p168 = pneg %p79
        %p169 = pneg %p108
        %p170 = pneg %p105
        %s171 = sand.u32 %s95, 1
        %s172 = scalar_lea.sflag [#allocation4], %s171
        %s173 = sand.u32 %s95, 1
        %s174 = smul.addr %s173, 16
        %s175 = scalar_lea.vmem [#allocation5], %s174
        %p176 = scmp.lt.s32.totalorder %s19, 1
        %s177 = scalar_select %p176, %s19, 1
        %s178 = scalar_lea.vmem %s0, %s177
        %v179 = vld [vmem:[%s1] sm:$0xff]
        %v180 = vld [vmem:[%s1 + $0x8] sm:$0xff]
        %v181 = vld [vmem:[%s178] sm:$0x1]
        %v182 = vld [vmem:[#allocation2] sm:$0xff]
        %v183 = vld [vmem:[#allocation2 + $0x8] sm:$0xff]
        %v185 = vlaneseq
        %v186 = vshrl.u32 %v185, 7
        %v187 = vsub.s32 0, %v186
        %v188 = vrot.slane %v181, %v187
        %189 = vset.pattern.permute.xlu0 0
        %190 = vperm.xlu0 %189, %v188
        %v191 = vpop.permute.xlu0 %190
        %v193 = vmul.f32 %v191, %v182
        %v194 = vmul.f32 %v191, %v183
        %v195 = vadd.f32 %v179, %v193
        %v196 = vadd.f32 %v180, %v194
        %197 = vst [vmem:[%s175] sm:$0xff] %v195
        %198 = vst [vmem:[%s175 + $0x8] sm:$0xff] %v196
        %s199 = sand.u32 %s95, 1
        %s200 = scalar_lea.sflag [#allocation4], %s199
        %s201 = sand.u32 %s95, 1
        %s202 = smul.addr %s201, 16
        %s203 = scalar_lea.vmem [#allocation5], %s202
        // Predicated region
        $region37: #{wave_source.1} parent=31 // pred_check
          %p204 = pneg %p105
        $region38: #{wave_source.1} parent=31 // pred_check_branch
          %206 = sbr.rel (%p204) target = $region40
        $region39: #{wave_source.1} parent=31 // pred_region
          %s208 = ssub.s32 256, 256
          %209 = vsyncadd %s200, %s208
          %s210 = smul.addr %s19, 2
          %s211 = smul.addr %s210, 128
          %s212 = scalar_lea.hbm %s4, %s211
          %s213 = sshll.u32 %s203, 4
          %s214 = int_to_ptr.vmem [resolvable:$true] %s213
          %219 = dma.vmem_to_hbm [thread:$0]  %s214, 256, %s212, %s200, 128, 128, 8
        $region40: #{wave_source.1} parent=31 // pred_fallthru
          _
      $region32: #{wave_source.1} parent=5 // pred_fallthru
        _
      %p220 = scmp.le.s32.totalorder 2, %s14
      // Predicated region
      $region41: #{wave_source.1} parent=5 // pred_check
        %p221 = pneg %p220
      $region42: #{wave_source.1} parent=5 // pred_check_branch
        %223 = sbr.rel (%p221) target = $region44
      $region43: #{wave_source.1} parent=5 // pred_region
        %s224 = ssub.s32 %s14, 2
        // Predicated region
        $region45: #{wave_source.1} parent=43 // pred_check
          %p225 = pneg %p111
        $region46: #{wave_source.1} parent=43 // pred_check_branch
          %227 = sbr.rel (%p225) target = $region48
        $region47: #{wave_source.1} parent=43 // pred_region
          %s228 = sand.u32 %s96, 1
          %s229 = scalar_lea.sflag [#allocation4], %s228
          %s230 = sand.u32 %s96, 1
          %s231 = smul.addr %s230, 16
          %s232 = scalar_lea.vmem [#allocation5], %s231
          %233 = dma.done %s229, 256
        $region48: #{wave_source.1} parent=43 // pred_fallthru
          _
      $region44: #{wave_source.1} parent=5 // pred_fallthru
        _
    $region6: #{wave_source.1} parent=1 // loop_footer
      %s18 = sadd.s32 1, %s14
    $region7: #{wave_source.1} parent=1 // loop_footer_branch
      %13 = sbr.rel target = $region3
    $region8: #{wave_source.1} parent=1 // loop_exit
      _
    %234 = vsyncpa [#allocation3], 1
    %s235 = scalar_lea.sflag [#allocation3], 1
    %236 = vsyncpa %s235, 1
    %237 = vsyncpa [#allocation4], 1
    %s238 = scalar_lea.sflag [#allocation4], 1
    %239 = vsyncpa %s238, 1

</llo_original>
